<compile_context>
chip_gen: v7x
topology: tpu7x:2x2x1
jax: 0.10.0
libtpu: 0.0.40
codegen_flags: <defaults>
</compile_context>

<pallas_src>
import math

import jax
import jax.numpy as jnp
from jax.experimental import pallas as pl
from jax.experimental.pallas import tpu as pltpu


# ----------------------------------------------------------------------------
# Helpers
# ----------------------------------------------------------------------------
def _round_up(n, m):
    return ((n + m - 1) // m) * m


def _choose_tile(n, max_tile=2048):
    # Lane-dense tiles (multiple of 128).  Prefer >= 4 tiles so the "parallel"
    # token axis splits evenly across v7x's two TensorCores; cap at 2048 tokens
    # (double-buffered bf16 (2, 96, 2048) input block plus the (64, 2048) f32
    # hidden intermediates are < 3 MiB -- far under VMEM on every generation;
    # on v5e a ~1024 cap would also be reasonable).
    t = (n // 4) // 128 * 128
    return max(128, min(max_tile, t if t > 0 else 128))


def _gelu_tanh(x):
    # tanh-approx GELU: tanh runs on the EUP slot and the remaining ~6 f32 VALU
    # ops/elem replace the ~15 of the erf formulation (GELU is the saturating
    # VALU work here -- the matmuls are tiny, so the MXU has huge slack).
    # Differs from PyTorch's exact-erf nn.GELU() by <~1e-3.
    # TODO(synk): on v6e/v7x this could run in bf16 (packed VPU); kept f32 so
    # the same kernel also runs on v5e (no bf16 VALU/EUP there).
    c0 = jnp.float32(0.7978845608028654)   # sqrt(2/pi)
    c1 = jnp.float32(0.044715)
    inner = c0 * x * (1.0 + c1 * x * x)
    return 0.5 * x * (1.0 + jnp.tanh(inner))


def _patchify(x, patch):
    """(B, C, T, H, W) NCDHW clip -> (K, N) bf16 slab, tokens on the lane axis.

    Token flat order is (B, T', H', W') row-major so scores reshape straight
    back to (B, 1, T', H', W').
    """
    B, C, T, H, W = x.shape
    pt, ph, pw = patch
    Tp, Hp, Wp = T // pt, H // ph, W // pw
    p = x.reshape(B, C, Tp, pt, Hp, ph, Wp, pw)
    # TODO(synk): this transpose+cast is one extra HBM round-trip of the only
    # large tensor; folding it into the pallas_call DMA needs a 6-D in-VMEM
    # relayout that risks Mosaic lowering failures, so it stays in XLA for now.
    p = p.transpose(1, 3, 5, 7, 0, 2, 4, 6)          # (C, pt, ph, pw, B, Tp, Hp, Wp)
    slab = p.reshape(C * pt * ph * pw, B * Tp * Hp * Wp).astype(jnp.bfloat16)
    return slab, (B, Tp, Hp, Wp)


# ----------------------------------------------------------------------------
# Kernel
# ----------------------------------------------------------------------------
def _fused_score_kernel(xs_ref, wc_ref, bc_ref, w2_ref, b2_ref, o_ref):
    """(patch-embed o fc_hid) -> GELU -> fc_last for every clip key in one grid
    step; tokens on lanes.  Grid = (num_tiles,) ["parallel"]."""
    acc = None
    for g in range(xs_ref.shape[0]):          # G in {1, 2}: static unroll
        # Pre-composed (Ch, K) @ (K, tile) on the MXU, bf16 in / f32 accumulate.
        # TODO(synk): the Swin-3D stages of VideoBackbone would act between the
        # patch embed and fc_hid here; re-split the composed matmul then.
        h = jnp.dot(wc_ref[g], xs_ref[g],
                    preferred_element_type=jnp.float32) + bc_ref[g]
        h = _gelu_tanh(h)                     # f32 VPU + EUP tanh
        # fc_last (width-1 output): VPU multiply + sublane reduction instead of
        # a 1-wide MXU matmul; the (1, tile) score row stays lane-dense.
        s = jnp.sum(h * w2_ref[g], axis=0, keepdims=True)
        acc = s if acc is None else acc + s
    o_ref[...] = acc + b2_ref[...]


# ----------------------------------------------------------------------------
# pallas_call wrapper
# ----------------------------------------------------------------------------
def pallas_fused_scores(xs, wc, bc, w2, b2_total):
    """xs: (G, K, N) bf16 token slabs (one per clip key).  wc/bc: pre-composed
    (patch-embed o fc_hid) weights/biases per key; w2: fc_last weights per key;
    b2_total: summed fc_last bias.  Returns key-summed scores, shape (N,)."""
    G, K, N = xs.shape
    Ch = wc.shape[1]

    tile = _choose_tile(N)
    Np = _round_up(N, tile)
    if Np != N:
        xs = jnp.pad(xs, ((0, 0), (0, 0), (0, Np - N)))
    num_tiles = Np // tile

    cost = pl.CostEstimate(
        flops=int(2 * G * Np * Ch * (K + 2)),
        transcendentals=int(G * Np * Ch),
        bytes_accessed=int(xs.size * 2 + wc.size * 2
                           + 4 * (bc.size + w2.size + b2_total.size) + 4 * Np),
    )

    out = pl.pallas_call(
        _fused_score_kernel,
        out_shape=jax.ShapeDtypeStruct((1, Np), jnp.float32),
        grid=(num_tiles,),
        in_specs=[
            pl.BlockSpec((G, K, tile), lambda i: (0, 0, i)),
            pl.BlockSpec((G, Ch, K), lambda i: (0, 0, 0)),
            pl.BlockSpec((G, Ch, 1), lambda i: (0, 0, 0)),
            pl.BlockSpec((G, Ch, 1), lambda i: (0, 0, 0)),
            pl.BlockSpec((1, 1), lambda i: (0, 0)),
        ],
        out_specs=pl.BlockSpec((1, tile), lambda i: (0, i)),
        compiler_params=pltpu.CompilerParams(dimension_semantics=("parallel",)),
        cost_estimate=cost,
    )(xs, wc, bc, w2, b2_total)
    return out[0, :N]


# ----------------------------------------------------------------------------
# Module pieces (parameters in plain JAX, compute in the Pallas kernel)
# ----------------------------------------------------------------------------
class PatchEmbedBackbone:
    """Stand-in for VideoBackbone (SwinTransformer3D swin-tiny-grpb).

    Implements the backbone's real first layer -- the 3D patch-embedding
    Conv3d(3, C, kernel=stride=(2,4,4)) -- inside the fused Pallas kernel.
    # TODO(synk): the Swin-3D transformer stages (fragment-biased window
    # attention, patch merging, final LayerNorm) of VideoBackbone are omitted.
    """

    def __init__(self, rng, embed_dim=32, patch=(2, 4, 4), in_chans=3):
        k1, k2 = jax.random.split(rng)
        kdim = in_chans * patch[0] * patch[1] * patch[2]
        self.patch = patch
        self.embed_dim = embed_dim
        self.kdim = kdim
        # Conv3d weight stored pre-transposed (Cout, Cin*kT*kH*kW), bf16 for MXU.
        self.wpeT = (jax.random.normal(k1, (embed_dim, kdim), jnp.float32)
                     * (1.0 / math.sqrt(kdim))).astype(jnp.bfloat16)
        self.bpe = jax.random.normal(k2, (embed_dim, 1), jnp.float32) * 0.02


class VQAHead:
    """fc_hid (1x1x1 Conv3d) -> GELU -> fc_last (1x1x1 Conv3d); dropout is the
    identity in inference/eval mode (the path DiViDeAddEvaluator exercises)."""

    def __init__(self, rng, in_channels=32, hidden_channels=64, dropout_ratio=0.5):
        k1, k2, k3, k4 = jax.random.split(rng, 4)
        self.w1T = (jax.random.normal(k1, (hidden_channels, in_channels), jnp.float32)
                    * (1.0 / math.sqrt(in_channels))).astype(jnp.bfloat16)
        self.b1 = jax.random.normal(k2, (hidden_channels, 1), jnp.float32) * 0.02
        self.w2 = jax.random.normal(k3, (hidden_channels, 1), jnp.float32) * (
            1.0 / math.sqrt(hidden_channels))
        self.b2 = jax.random.normal(k4, (1, 1), jnp.float32) * 0.02
        # TODO(synk): training-mode dropout (p=dropout_ratio) is not implemented.


class DiViDeAddEvaluator:
    def __init__(
        self,
        rng,
        backbone_preserve_keys="fragments,resize",
        multi=False,
        layer=-1,
        backbone=None,
        divide_head=False,
        vqa_head=None,
        var=False,
        embed_dim=32,
        patch_size=(2, 4, 4),
    ):
        if backbone is None:
            backbone = dict(resize={"window_size": (4, 4, 4)},
                            fragments={"window_size": (4, 4, 4)})
        if vqa_head is None:
            vqa_head = dict(in_channels=embed_dim, hidden_channels=64)
        self.backbone_preserve_keys = backbone_preserve_keys.split(",")
        self.multi = multi
        self.layer = layer
        self.divide_head = divide_head
        keys = iter(jax.random.split(rng, 16))
        self.backbones = {}
        for key in backbone:
            if key not in self.backbone_preserve_keys:
                continue
            self.backbones[key] = PatchEmbedBackbone(next(keys), embed_dim, patch_size)
        if divide_head:
            self.heads = {
                key: VQAHead(next(keys), **vqa_head)
                for key in backbone
                if key in self.backbone_preserve_keys
            }
        else:
            self.vqa_head = VQAHead(next(keys), **vqa_head)
        # TODO(synk): VARHead (var=True) branch not implemented.

    @staticmethod
    def _compose_entry(backbone, head):
        # While the Swin-3D stages are a no-op there is no nonlinearity between
        # the patch-embed Conv3d and fc_hid, so fold them into a single (Ch, K)
        # matmul: Wc = w1 @ wpe, bc = w1 @ bpe + b1 (tiny, host-side, exact in
        # f32 before the bf16 cast).
        # TODO(synk): revert once real backbone stages act between the layers.
        w1f = head.w1T.astype(jnp.float32)
        wc = (w1f @ backbone.wpeT.astype(jnp.float32)).astype(jnp.bfloat16)
        bc = w1f @ backbone.bpe + head.b1
        return wc, bc

    def _score_group(self, group):
        """group: list of (key, backbone, head, patches(K,N), dims); all entries
        must share the slab shape.  Returns per-key-summed scores (B,1,T',H',W')."""
        xs = jnp.stack([e[3] for e in group], axis=0)                  # (G, K, N)
        composed = [self._compose_entry(e[1], e[2]) for e in group]
        wc = jnp.stack([c[0] for c in composed], axis=0)               # (G, Ch, K)
        bc = jnp.stack([c[1] for c in composed], axis=0)               # (G, Ch, 1)
        w2 = jnp.stack([e[2].w2 for e in group], axis=0)               # (G, Ch, 1)
        b2_total = group[0][2].b2
        for e in group[1:]:
            b2_total = b2_total + e[2].b2                              # (1, 1)
        flat = pallas_fused_scores(xs, wc, bc, w2, b2_total)           # (N,)
        B, Tp, Hp, Wp = group[0][4]
        return flat.reshape(B, Tp, Hp, Wp)[:, None]

    def forward(self, vclips, inference=True, return_pooled_feats=False,
                reduce_scores=True, pooled=False, **kwargs):
        # inference vs. training only toggles eval()/train() (dropout); the math
        # below matches the eval / no_grad path, where dropout is identity.
        feats = {}
        entries = []
        for key in vclips:
            bkey = key.split("_")[0]
            backbone = self.backbones[bkey]
            head = self.heads[bkey] if self.divide_head else self.vqa_head
            patches, dims = _patchify(vclips[key], backbone.patch)
            entries.append((key, backbone, head, patches, dims))
            if return_pooled_feats:
                B = dims[0]
                # feat.mean((-3,-2,-1)) is linear in the (affine) patch embed:
                # pool the slab per batch first and apply wpe to the tiny (K, B)
                # mean -- no second kernel pass over the slab and no (E, N) f32
                # feature round-trip in HBM.
                # TODO(synk): only valid while the Swin stages are a no-op.
                slab_mean = patches.astype(jnp.float32).reshape(
                    backbone.kdim, B, -1).mean(axis=-1)                 # (K, B)
                feat_mean = (backbone.wpeT.astype(jnp.float32) @ slab_mean
                             + backbone.bpe)                            # (E, B)
                feats[key] = feat_mean.T                                # (B, E)

        if reduce_scores:
            same_shape = len({e[3].shape for e in entries}) == 1
            if len(entries) > 1 and same_shape:
                # All clip keys scored (and summed) inside one pallas_call.
                scores = self._score_group(entries)
            else:
                per = [self._score_group([e]) for e in entries]
                scores = per[0]
                for s in per[1:]:
                    scores = scores + s        # trivial mem-bound add -> plain XLA
            if pooled:
                # torch.mean(scores, (1, 2, 3, 4)) -> trivial reduce, plain XLA
                scores = jnp.mean(scores, axis=(1, 2, 3, 4))
        else:
            scores = [self._score_group([e]) for e in entries]

        if return_pooled_feats:
            return scores, feats
        return scores


# ----------------------------------------------------------------------------
if __name__ == "__main__":
    root = jax.random.PRNGKey(0)
    k_model, k_frag, k_res = jax.random.split(root, 3)

    # Small synthetic video clips, PyTorch NCDHW layout: (B, 3, T, H, W)
    B, Cin, T, H, W = 2, 3, 8, 32, 32
    vclips = {
        "fragments": jax.random.normal(k_frag, (B, Cin, T, H, W), jnp.float32),
        "resize": jax.random.normal(k_res, (B, Cin, T, H, W), jnp.float32),
    }

    model = DiViDeAddEvaluator(
        k_model,
        embed_dim=32,
        vqa_head=dict(in_channels=32, hidden_channels=64),
    )

    # Default path: inference=True, reduce_scores=True, pooled=False
    scores = jax.block_until_ready(model.forward(vclips))
    assert scores.shape == (B, 1, T // 2, H // 4, W // 4), scores.shape

    # Pooled path: torch.mean(scores, (1, 2, 3, 4)) -> shape (B,)
    pooled_scores = jax.block_until_ready(model.forward(vclips, pooled=True))
    assert pooled_scores.shape == (B,), pooled_scores.shape

    # return_pooled_feats path: feats[key] = feat.mean((-3,-2,-1)) -> (B, C)
    _, pooled_feats = model.forward(vclips, return_pooled_feats=True)
    for v in pooled_feats.values():
        assert jax.block_until_ready(v).shape == (B, 32), v.shape

    print("KERNEL_OK")
</pallas_src>

<mosaic_0001>
module attributes {stable_mosaic.version = 11 : i64} {
  func.func @_fused_score_kernel(%arg0: i32, %arg1: memref<2x96x128xbf16, #tpu.memory_space<vmem>>, %arg2: memref<2x64x96xbf16, #tpu.memory_space<vmem>>, %arg3: memref<2x64x1xf32, #tpu.memory_space<vmem>>, %arg4: memref<2x64x1xf32, #tpu.memory_space<vmem>>, %arg5: memref<1x1xf32, #tpu.memory_space<vmem>>, %arg6: memref<1x128xf32, #tpu.memory_space<vmem>>) attributes {dimension_semantics = [#tpu.dimension_semantics<parallel>], iteration_bounds = array<i64: 4>, scalar_prefetch = 0 : i64, scratch_operands = 0 : i64, tpu.core_type = #tpu.core_type<tc>, window_params = [{transform_indices = @transform_0, window_bounds = array<i64: 2, 96, 128>}, {pipeline_mode = #tpu.pipeline_mode<synchronous>, transform_indices = @transform_1, window_bounds = array<i64: 2, 64, 96>}, {pipeline_mode = #tpu.pipeline_mode<synchronous>, transform_indices = @transform_2, window_bounds = array<i64: 2, 64, 1>}, {pipeline_mode = #tpu.pipeline_mode<synchronous>, transform_indices = @transform_3, window_bounds = array<i64: 2, 64, 1>}, {pipeline_mode = #tpu.pipeline_mode<synchronous>, transform_indices = @transform_4, window_bounds = array<i64: 1, 1>}, {transform_indices = @transform_5, window_bounds = array<i64: 1, 128>}]} {
    %c0 = arith.constant 0 : index
    %c0_0 = arith.constant 0 : index
    %c0_1 = arith.constant 0 : index
    %0 = vector.load %arg2[%c0, %c0_0, %c0_1] : memref<2x64x96xbf16, #tpu.memory_space<vmem>>, vector<1x64x96xbf16>
    %1 = vector.shape_cast %0 : vector<1x64x96xbf16> to vector<64x96xbf16>
    %c0_2 = arith.constant 0 : index
    %c0_3 = arith.constant 0 : index
    %c0_4 = arith.constant 0 : index
    %2 = vector.load %arg1[%c0_2, %c0_3, %c0_4] : memref<2x96x128xbf16, #tpu.memory_space<vmem>>, vector<1x96x128xbf16>
    %3 = vector.shape_cast %2 : vector<1x96x128xbf16> to vector<96x128xbf16>
    %cst = arith.constant dense<0.000000e+00> : vector<64x128xf32>
    %4 = tpu.matmul %1, %3, %cst {dimension_numbers = #tpu.dot_dimension_numbers<[1], [0], [0], [1], [0, 0, 1, 1], [], []>} : vector<64x96xbf16>, vector<96x128xbf16>, vector<64x128xf32> -> vector<64x128xf32>
    %c0_5 = arith.constant 0 : index
    %c0_6 = arith.constant 0 : index
    %c0_7 = arith.constant 0 : index
    %5 = vector.load %arg3[%c0_5, %c0_6, %c0_7] : memref<2x64x1xf32, #tpu.memory_space<vmem>>, vector<1x64x1xf32>
    %6 = vector.shape_cast %5 : vector<1x64x1xf32> to vector<64x1xf32>
    %7 = vector.broadcast %6 : vector<64x1xf32> to vector<64x128xf32>
    %8 = arith.addf %4, %7 : vector<64x128xf32>
    %cst_8 = arith.constant 0.797884583 : f32
    %9 = vector.broadcast %cst_8 : f32 to vector<64x128xf32>
    %10 = arith.mulf %9, %8 : vector<64x128xf32>
    %cst_9 = arith.constant 4.471500e-02 : f32
    %11 = vector.broadcast %cst_9 : f32 to vector<64x128xf32>
    %12 = arith.mulf %11, %8 : vector<64x128xf32>
    %13 = arith.mulf %12, %8 : vector<64x128xf32>
    %cst_10 = arith.constant 1.000000e+00 : f32
    %14 = vector.broadcast %cst_10 : f32 to vector<64x128xf32>
    %15 = arith.addf %14, %13 : vector<64x128xf32>
    %16 = arith.mulf %10, %15 : vector<64x128xf32>
    %cst_11 = arith.constant 5.000000e-01 : f32
    %17 = vector.broadcast %cst_11 : f32 to vector<64x128xf32>
    %18 = arith.mulf %17, %8 : vector<64x128xf32>
    %19 = math.tanh %16 : vector<64x128xf32>
    %cst_12 = arith.constant 1.000000e+00 : f32
    %20 = vector.broadcast %cst_12 : f32 to vector<64x128xf32>
    %21 = arith.addf %20, %19 : vector<64x128xf32>
    %22 = arith.mulf %18, %21 : vector<64x128xf32>
    %c0_13 = arith.constant 0 : index
    %c0_14 = arith.constant 0 : index
    %c0_15 = arith.constant 0 : index
    %23 = vector.load %arg4[%c0_13, %c0_14, %c0_15] : memref<2x64x1xf32, #tpu.memory_space<vmem>>, vector<1x64x1xf32>
    %24 = vector.shape_cast %23 : vector<1x64x1xf32> to vector<64x1xf32>
    %25 = vector.broadcast %24 : vector<64x1xf32> to vector<64x128xf32>
    %26 = arith.mulf %22, %25 : vector<64x128xf32>
    %cst_16 = arith.constant dense<0.000000e+00> : vector<128xf32>
    %27 = vector.multi_reduction <add>, %26, %cst_16 [0] : vector<64x128xf32> to vector<128xf32>
    %28 = vector.shape_cast %27 : vector<128xf32> to vector<1x128xf32>
    %c1 = arith.constant 1 : index
    %c0_17 = arith.constant 0 : index
    %c0_18 = arith.constant 0 : index
    %29 = vector.load %arg2[%c1, %c0_17, %c0_18] : memref<2x64x96xbf16, #tpu.memory_space<vmem>>, vector<1x64x96xbf16>
    %30 = vector.shape_cast %29 : vector<1x64x96xbf16> to vector<64x96xbf16>
    %c1_19 = arith.constant 1 : index
    %c0_20 = arith.constant 0 : index
    %c0_21 = arith.constant 0 : index
    %31 = vector.load %arg1[%c1_19, %c0_20, %c0_21] : memref<2x96x128xbf16, #tpu.memory_space<vmem>>, vector<1x96x128xbf16>
    %32 = vector.shape_cast %31 : vector<1x96x128xbf16> to vector<96x128xbf16>
    %cst_22 = arith.constant dense<0.000000e+00> : vector<64x128xf32>
    %33 = tpu.matmul %30, %32, %cst_22 {dimension_numbers = #tpu.dot_dimension_numbers<[1], [0], [0], [1], [0, 0, 1, 1], [], []>} : vector<64x96xbf16>, vector<96x128xbf16>, vector<64x128xf32> -> vector<64x128xf32>
    %c1_23 = arith.constant 1 : index
    %c0_24 = arith.constant 0 : index
    %c0_25 = arith.constant 0 : index
    %34 = vector.load %arg3[%c1_23, %c0_24, %c0_25] : memref<2x64x1xf32, #tpu.memory_space<vmem>>, vector<1x64x1xf32>
    %35 = vector.shape_cast %34 : vector<1x64x1xf32> to vector<64x1xf32>
    %36 = vector.broadcast %35 : vector<64x1xf32> to vector<64x128xf32>
    %37 = arith.addf %33, %36 : vector<64x128xf32>
    %cst_26 = arith.constant 0.797884583 : f32
    %38 = vector.broadcast %cst_26 : f32 to vector<64x128xf32>
    %39 = arith.mulf %38, %37 : vector<64x128xf32>
    %cst_27 = arith.constant 4.471500e-02 : f32
    %40 = vector.broadcast %cst_27 : f32 to vector<64x128xf32>
    %41 = arith.mulf %40, %37 : vector<64x128xf32>
    %42 = arith.mulf %41, %37 : vector<64x128xf32>
    %cst_28 = arith.constant 1.000000e+00 : f32
    %43 = vector.broadcast %cst_28 : f32 to vector<64x128xf32>
    %44 = arith.addf %43, %42 : vector<64x128xf32>
    %45 = arith.mulf %39, %44 : vector<64x128xf32>
    %cst_29 = arith.constant 5.000000e-01 : f32
    %46 = vector.broadcast %cst_29 : f32 to vector<64x128xf32>
    %47 = arith.mulf %46, %37 : vector<64x128xf32>
    %48 = math.tanh %45 : vector<64x128xf32>
    %cst_30 = arith.constant 1.000000e+00 : f32
    %49 = vector.broadcast %cst_30 : f32 to vector<64x128xf32>
    %50 = arith.addf %49, %48 : vector<64x128xf32>
    %51 = arith.mulf %47, %50 : vector<64x128xf32>
    %c1_31 = arith.constant 1 : index
    %c0_32 = arith.constant 0 : index
    %c0_33 = arith.constant 0 : index
    %52 = vector.load %arg4[%c1_31, %c0_32, %c0_33] : memref<2x64x1xf32, #tpu.memory_space<vmem>>, vector<1x64x1xf32>
    %53 = vector.shape_cast %52 : vector<1x64x1xf32> to vector<64x1xf32>
    %54 = vector.broadcast %53 : vector<64x1xf32> to vector<64x128xf32>
    %55 = arith.mulf %51, %54 : vector<64x128xf32>
    %cst_34 = arith.constant dense<0.000000e+00> : vector<128xf32>
    %56 = vector.multi_reduction <add>, %55, %cst_34 [0] : vector<64x128xf32> to vector<128xf32>
    %57 = vector.shape_cast %56 : vector<128xf32> to vector<1x128xf32>
    %58 = arith.addf %28, %57 : vector<1x128xf32>
    %c0_35 = arith.constant 0 : index
    %c0_36 = arith.constant 0 : index
    %59 = vector.load %arg5[%c0_35, %c0_36] : memref<1x1xf32, #tpu.memory_space<vmem>>, vector<1x1xf32>
    %60 = vector.broadcast %59 : vector<1x1xf32> to vector<1x128xf32>
    %61 = arith.addf %58, %60 : vector<1x128xf32>
    %c0_37 = arith.constant 0 : index
    %c0_38 = arith.constant 0 : index
    %62 = vector.load %arg6[%c0_37, %c0_38] : memref<1x128xf32, #tpu.memory_space<vmem>>, vector<1x128xf32>
    tpu.vector_store %arg6[%c0_37, %c0_38], %61 {strides = array<i32>} : memref<1x128xf32, #tpu.memory_space<vmem>>, vector<1x128xf32>,
    return
  }
  func.func @transform_0(%arg0: i32) -> (i32, i32, i32) {
    %c0_i32 = arith.constant 0 : i32
    %c0_i32_0 = arith.constant 0 : i32
    %c0_i32_1 = arith.constant 0 : i32
    return %c0_i32, %c0_i32_0, %arg0 : i32, i32, i32
  }
  func.func @transform_1(%arg0: i32) -> (i32, i32, i32) {
    %c0_i32 = arith.constant 0 : i32
    %c0_i32_0 = arith.constant 0 : i32
    %c0_i32_1 = arith.constant 0 : i32
    %c0_i32_2 = arith.constant 0 : i32
    return %c0_i32, %c0_i32_0, %c0_i32_1 : i32, i32, i32
  }
  func.func @transform_2(%arg0: i32) -> (i32, i32, i32) {
    %c0_i32 = arith.constant 0 : i32
    %c0_i32_0 = arith.constant 0 : i32
    %c0_i32_1 = arith.constant 0 : i32
    %c0_i32_2 = arith.constant 0 : i32
    return %c0_i32, %c0_i32_0, %c0_i32_1 : i32, i32, i32
  }
  func.func @transform_3(%arg0: i32) -> (i32, i32, i32) {
    %c0_i32 = arith.constant 0 : i32
    %c0_i32_0 = arith.constant 0 : i32
    %c0_i32_1 = arith.constant 0 : i32
    %c0_i32_2 = arith.constant 0 : i32
    return %c0_i32, %c0_i32_0, %c0_i32_1 : i32, i32, i32
  }
  func.func @transform_4(%arg0: i32) -> (i32, i32) {
    %c0_i32 = arith.constant 0 : i32
    %c0_i32_0 = arith.constant 0 : i32
    %c0_i32_1 = arith.constant 0 : i32
    return %c0_i32, %c0_i32_0 : i32, i32
  }
  func.func @transform_5(%arg0: i32) -> (i32, i32) {
    %c0_i32 = arith.constant 0 : i32
    %c0_i32_0 = arith.constant 0 : i32
    return %c0_i32, %arg0 : i32, i32
  }
}

</mosaic_0001>

<llo_original>
// kernel: tpu_custom_call.1
$region0: #{tpu_custom_call.1}
  #allocation0 [shape = 'u32[]', space=smem, size = 0x4, offset = 0x4, fixed_abs, tag = 'smem constant byte address 0x4 - core index']
  #allocation1 [shape = 'u32[144,128]{1,0:T(1,128)}', space=vmem, size = 0x12000, scoped, tag = 'internal scratch']
  #allocation2 [shape = 'f32[1,1]{1,0:T(1,128)S(1)}', space=vmem, size = 0x200, scoped, tag = 'scoped memory for tpu_custom_call.1']
  %s0 = inlined_call_operand.hbm [shape: bf16[2,96,512], index: 0, kind: input, shape index: {}]
  %s1 = inlined_call_operand.vmem [shape: bf16[2,64,96], index: 1, kind: input, shape index: {}]
  %s2 = inlined_call_operand.vmem [shape: f32[2,64,1], index: 2, kind: input, shape index: {}]
  %s3 = inlined_call_operand.vmem [shape: f32[2,64,1], index: 3, kind: input, shape index: {}]
  %s4 = inlined_call_operand.<no memory space> [shape: f32[1,1], index: 4, kind: input, shape index: {}]
  %s5 = inlined_call_operand.hbm [shape: f32[1,512], index: 5, kind: output, shape index: {}]
  %s6 = sld [smem:[#allocation0]]
  $region57: #{tpu_custom_call.1} parent=0
    _
  %s8 = ssub.s32 1, %s6
  %s9 = scalar_select 0, %s8, %s6
  %v10 = vstv %s4
  %11 = vst [vmem:[#allocation2] sm:$0x1] %v10
  $region1: #{tpu_custom_call.1} parent=0
    #allocation3 [shape = 'u8[98304]{0}', space=vmem, size = 0x18000, scoped, tag = 'input window, operand 0']
    #allocation4 [shape = 's32[2]{0}', space=sflag, size = 0x8, scoped, tag = 'scoped memory for tpu_custom_call.1']
    #allocation5 [shape = 's32[2]{0}', space=sflag, size = 0x8, scoped, tag = 'scoped memory for tpu_custom_call.1']
    #allocation6 [shape = 'u8[1024]{0}', space=vmem, size = 0x400, scoped, tag = 'output window, operand 0']
    %12 = vsyncpa [#allocation4], 0
    %s13 = scalar_lea.sflag [#allocation4], 1
    %14 = vsyncpa %s13, 0
    %15 = vsyncpa [#allocation5], 0
    %s16 = scalar_lea.sflag [#allocation5], 1
    %17 = vsyncpa %s16, 0
    loop: start=0, step=1, limit=6
    $region2: #{tpu_custom_call.1} parent=1 // loop_pre_header
      _
    $region3: #{tpu_custom_call.1} parent=1 // loop_header
      %s19 = sphi 0, %s23
      %p20 = scmp.ge.s32.totalorder %s19, 6
      %s29 = sphi 0, %s31
      %s32 = sphi 0, %s29
      %s33 = sphi 0, %s32
      %s49 = sphi 0, %s33
      %s53 = sphi 0, %s53
      %s55 = sphi 0, %s53
      %s56 = sphi 0, %s55
      %s70 = sphi 0, %s56
      %s74 = sphi 0, %s74
      %s76 = sphi 0, %s74
      %s77 = sphi 0, %s76
      %s91 = sphi 0, %s77
      %s95 = sphi 0, %s95
      %s97 = sphi 0, %s95
      %s98 = sphi 0, %s97
      %s112 = sphi 0, %s98
      %s116 = sphi 0, %s116
      %s118 = sphi 0, %s116
      %s119 = sphi 0, %s118
      %s133 = sphi 0, %s119
      %s139 = sphi 0, %s141
      %s142 = sphi 0, %s139
      %s143 = sphi 0, %s142
      %s159 = sphi 0, %s143
    $region4: #{tpu_custom_call.1} parent=1 // loop_header_branch
      %22 = sbr.rel (%p20) target = $region8
    $region5: #{tpu_custom_call.1} parent=1 // loop_body
      %s24 = ssub.s32 %s19, 1
      %s25 = ssub.s32 %s19, 2
      %s26 = sadd.s32 %s19, 1
      %s27 = ssub.s32 %s19, %s26
      %p28 = scmp.eq.s32.totalorder %s27, 0
      %s30 = sadd.s32 %s29, 1
      %s31 = scalar_select %p28, %s29, %s30
      %p34 = pneg %p28
      %p35 = scmp.eq.s32.totalorder %s19, 3
      %p36 = por %p34, %p35
      %p37 = scmp.ne.s32.totalorder %s29, %s32
      %p38 = scmp.eq.s32.totalorder %s19, 0
      %p39 = por %p37, %p38
      %p40 = scmp.ne.s32.totalorder %s29, %s32
      %p41 = scmp.eq.s32.totalorder %s24, 3
      %p42 = por %p40, %p41
      %p43 = scmp.ne.s32.totalorder %s32, %s33
      %p44 = scmp.eq.s32.totalorder %s24, 0
      %p45 = por %p43, %p44
      %p46 = scmp.ne.s32.totalorder %s32, %s33
      %p47 = scmp.eq.s32.totalorder %s25, 3
      %p48 = por %p46, %p47
      %p50 = scmp.ne.s32.totalorder %s33, %s49
      %p51 = scmp.eq.s32.totalorder %s25, 0
      %p52 = por %p50, %p51
      %s54 = sadd.s32 %s53, 1
      %p57 = scmp.eq.s32.totalorder %s19, 3
      %p58 = scmp.ne.s32.totalorder %s53, %s55
      %p59 = scmp.eq.s32.totalorder %s19, 0
      %p60 = por %p58, %p59
      %p61 = scmp.ne.s32.totalorder %s53, %s55
      %p62 = scmp.eq.s32.totalorder %s24, 3
      %p63 = por %p61, %p62
      %p64 = scmp.ne.s32.totalorder %s55, %s56
      %p65 = scmp.eq.s32.totalorder %s24, 0
      %p66 = por %p64, %p65
      %p67 = scmp.ne.s32.totalorder %s55, %s56
      %p68 = scmp.eq.s32.totalorder %s25, 3
      %p69 = por %p67, %p68
      %p71 = scmp.ne.s32.totalorder %s56, %s70
      %p72 = scmp.eq.s32.totalorder %s25, 0
      %p73 = por %p71, %p72
      %s75 = sadd.s32 %s74, 1
      %p78 = scmp.eq.s32.totalorder %s19, 3
      %p79 = scmp.ne.s32.totalorder %s74, %s76
      %p80 = scmp.eq.s32.totalorder %s19, 0
      %p81 = por %p79, %p80
      %p82 = scmp.ne.s32.totalorder %s74, %s76
      %p83 = scmp.eq.s32.totalorder %s24, 3
      %p84 = por %p82, %p83
      %p85 = scmp.ne.s32.totalorder %s76, %s77
      %p86 = scmp.eq.s32.totalorder %s24, 0
      %p87 = por %p85, %p86
      %p88 = scmp.ne.s32.totalorder %s76, %s77
      %p89 = scmp.eq.s32.totalorder %s25, 3
      %p90 = por %p88, %p89
      %p92 = scmp.ne.s32.totalorder %s77, %s91
      %p93 = scmp.eq.s32.totalorder %s25, 0
      %p94 = por %p92, %p93
      %s96 = sadd.s32 %s95, 1
      %p99 = scmp.eq.s32.totalorder %s19, 3
      %p100 = scmp.ne.s32.totalorder %s95, %s97
      %p101 = scmp.eq.s32.totalorder %s19, 0
      %p102 = por %p100, %p101
      %p103 = scmp.ne.s32.totalorder %s95, %s97
      %p104 = scmp.eq.s32.totalorder %s24, 3
      %p105 = por %p103, %p104
      %p106 = scmp.ne.s32.totalorder %s97, %s98
      %p107 = scmp.eq.s32.totalorder %s24, 0
      %p108 = por %p106, %p107
      %p109 = scmp.ne.s32.totalorder %s97, %s98
      %p110 = scmp.eq.s32.totalorder %s25, 3
      %p111 = por %p109, %p110
      %p113 = scmp.ne.s32.totalorder %s98, %s112
      %p114 = scmp.eq.s32.totalorder %s25, 0
      %p115 = por %p113, %p114
      %s117 = sadd.s32 %s116, 1
      %p120 = scmp.eq.s32.totalorder %s19, 3
      %p121 = scmp.ne.s32.totalorder %s116, %s118
      %p122 = scmp.eq.s32.totalorder %s19, 0
      %p123 = por %p121, %p122
      %p124 = scmp.ne.s32.totalorder %s116, %s118
      %p125 = scmp.eq.s32.totalorder %s24, 3
      %p126 = por %p124, %p125
      %p127 = scmp.ne.s32.totalorder %s118, %s119
      %p128 = scmp.eq.s32.totalorder %s24, 0
      %p129 = por %p127, %p128
      %p130 = scmp.ne.s32.totalorder %s118, %s119
      %p131 = scmp.eq.s32.totalorder %s25, 3
      %p132 = por %p130, %p131
      %p134 = scmp.ne.s32.totalorder %s119, %s133
      %p135 = scmp.eq.s32.totalorder %s25, 0
      %p136 = por %p134, %p135
      %s137 = ssub.s32 %s19, %s26
      %p138 = scmp.eq.s32.totalorder %s137, 0
      %s140 = sadd.s32 %s139, 1
      %s141 = scalar_select %p138, %s139, %s140
      %p144 = pneg %p138
      %p145 = scmp.eq.s32.totalorder %s19, 3
      %p146 = por %p144, %p145
      %p147 = scmp.ne.s32.totalorder %s139, %s142
      %p148 = scmp.eq.s32.totalorder %s19, 0
      %p149 = por %p147, %p148
      %p150 = scmp.ne.s32.totalorder %s139, %s142
      %p151 = scmp.eq.s32.totalorder %s24, 3
      %p152 = por %p150, %p151
      %p153 = scmp.ne.s32.totalorder %s142, %s143
      %p154 = scmp.eq.s32.totalorder %s24, 0
      %p155 = por %p153, %p154
      %p156 = scmp.ne.s32.totalorder %s142, %s143
      %p157 = scmp.eq.s32.totalorder %s25, 3
      %p158 = por %p156, %p157
      %p160 = scmp.ne.s32.totalorder %s143, %s159
      %p161 = scmp.eq.s32.totalorder %s25, 0
      %p162 = por %p160, %p161
      %p163 = scmp.le.s32.totalorder 1, %s19
      %p164 = scmp.lt.s32.totalorder %s19, 5
      %p165 = pnand %p163, %p164
      %p166 = pneg %p165
      // Predicated region
      $region9: #{tpu_custom_call.1} parent=5 // pred_check
        _
      $region10: #{tpu_custom_call.1} parent=5 // pred_check_branch
        %168 = sbr.rel (%p165) target = $region12
      $region11: #{tpu_custom_call.1} parent=5 // pred_region
        %s169 = ssub.s32 %s19, 1
        // Predicated region
        $region13: #{tpu_custom_call.1} parent=11 // pred_check
          %p170 = pneg %p66
        $region14: #{tpu_custom_call.1} parent=11 // pred_check_branch
          %172 = sbr.rel (%p170) target = $region16
        $region15: #{tpu_custom_call.1} parent=11 // pred_region
          _
        $region16: #{tpu_custom_call.1} parent=11 // pred_fallthru
          _
        // Predicated region
        $region17: #{tpu_custom_call.1} parent=11 // pred_check
          %p173 = pneg %p87
        $region18: #{tpu_custom_call.1} parent=11 // pred_check_branch
          %175 = sbr.rel (%p173) target = $region20
        $region19: #{tpu_custom_call.1} parent=11 // pred_region
          _
        $region20: #{tpu_custom_call.1} parent=11 // pred_fallthru
          _
        // Predicated region
        $region21: #{tpu_custom_call.1} parent=11 // pred_check
          %p176 = pneg %p108
        $region22: #{tpu_custom_call.1} parent=11 // pred_check_branch
          %178 = sbr.rel (%p176) target = $region24
        $region23: #{tpu_custom_call.1} parent=11 // pred_region
          _
        $region24: #{tpu_custom_call.1} parent=11 // pred_fallthru
          _
        // Predicated region
        $region25: #{tpu_custom_call.1} parent=11 // pred_check
          %p179 = pneg %p129
        $region26: #{tpu_custom_call.1} parent=11 // pred_check_branch
          %181 = sbr.rel (%p179) target = $region28
        $region27: #{tpu_custom_call.1} parent=11 // pred_region
          _
        $region28: #{tpu_custom_call.1} parent=11 // pred_fallthru
          _
      $region12: #{tpu_custom_call.1} parent=5 // pred_fallthru
        _
      %p182 = scmp.lt.s32.totalorder %s19, 4
      // Predicated region
      $region29: #{tpu_custom_call.1} parent=5 // pred_check
        %p183 = pneg %p182
      $region30: #{tpu_custom_call.1} parent=5 // pred_check_branch
        %185 = sbr.rel (%p183) target = $region32
      $region31: #{tpu_custom_call.1} parent=5 // pred_region
        // Predicated region
        $region33: #{tpu_custom_call.1} parent=31 // pred_check
          %p186 = pneg %p39
        $region34: #{tpu_custom_call.1} parent=31 // pred_check_branch
          %188 = sbr.rel (%p186) target = $region36
        $region35: #{tpu_custom_call.1} parent=31 // pred_region
          %s189 = sand.u32 %s29, 1
          %s190 = scalar_lea.sflag [#allocation4], %s189
          %s191 = sand.u32 %s29, 1
          %s192 = smul.addr %s191, 96
          %s193 = scalar_lea.vmem [#allocation3], %s192
          %s195 = ssub.s32 1536, 1536
          %196 = vsyncadd %s190, %s195
          %s197 = smul.addr %s19, 64
          %s198 = scalar_lea.hbm %s0, %s197
          %s199 = sshll.u32 %s193, 4
          %s200 = int_to_ptr.vmem [resolvable:$true] %s199
          %205 = dma.hbm_to_vmem [thread:$0]  %s198, 1536, %s200, %s190, 256, 64, 4
        $region36: #{tpu_custom_call.1} parent=31 // pred_fallthru
          _
      $region32: #{tpu_custom_call.1} parent=5 // pred_fallthru
        _
      %p206 = scmp.le.s32.totalorder 1, %s19
      %p207 = scmp.lt.s32.totalorder %s19, 5
      %p208 = pnand %p206, %p207
      %p209 = pneg %p208
      // Predicated region
      $region37: #{tpu_custom_call.1} parent=5 // pred_check
        _
      $region38: #{tpu_custom_call.1} parent=5 // pred_check_branch
        %211 = sbr.rel (%p208) target = $region40
      $region39: #{tpu_custom_call.1} parent=5 // pred_region
        %s212 = ssub.s32 %s19, 1
        %s213 = sand.u32 %s32, 1
        %s214 = scalar_lea.sflag [#allocation4], %s213
        %s215 = sand.u32 %s32, 1
        %s216 = smul.addr %s215, 96
        %s217 = scalar_lea.vmem [#allocation3], %s216
        // Predicated region
        $region41: #{tpu_custom_call.1} parent=39 // pred_check
          %p218 = pneg %p45
        $region42: #{tpu_custom_call.1} parent=39 // pred_check_branch
          %220 = sbr.rel (%p218) target = $region44
        $region43: #{tpu_custom_call.1} parent=39 // pred_region
          %221 = dma.done %s214, 1536
        $region44: #{tpu_custom_call.1} parent=39 // pred_fallthru
          _
        %s222 = sand.u32 %s32, 1
        %s223 = scalar_lea.sflag [#allocation4], %s222
        %s224 = sand.u32 %s32, 1
        %s225 = smul.addr %s224, 96
        %s226 = scalar_lea.vmem [#allocation3], %s225
        %p227 = pneg %p45
        %p228 = pneg %p42
        %p229 = pneg %p66
        %p230 = pneg %p63
        %p231 = pneg %p87
        %p232 = pneg %p84
        %p233 = pneg %p108
        %p234 = pneg %p105
        %p235 = pneg %p129
        %p236 = pneg %p126
        %p237 = pneg %p155
        %p238 = pneg %p152
        %s239 = sand.u32 %s142, 1
        %s240 = scalar_lea.sflag [#allocation5], %s239
        %s241 = sand.u32 %s142, 1
        %s242 = scalar_lea.vmem [#allocation6], %s241
        %v244 = vld [vmem:[%s1] sm:$0xf]
        %v245 = vld [vmem:[%s1 + $0x4] sm:$0xf]
        %v246 = vld [vmem:[%s1 + $0x8] sm:$0xf]
        %v247 = vld [vmem:[%s1 + $0xc] sm:$0xf]
        %v248 = vld [vmem:[%s1 + $0x10] sm:$0xf]
        %v249 = vld [vmem:[%s1 + $0x14] sm:$0xf]
        %v250 = vld [vmem:[%s1 + $0x18] sm:$0xf]
        %v251 = vld [vmem:[%s1 + $0x1c] sm:$0xf]
        %v252 = vld [vmem:[%s217] sm:$0xf]
        %v253 = vld [vmem:[%s217 + $0x4] sm:$0xf]
        %v254 = vld [vmem:[%s217 + $0x8] sm:$0xf]
        %v255 = vld [vmem:[%s217 + $0xc] sm:$0xf]
        %v256 = vld [vmem:[%s217 + $0x10] sm:$0xf]
        %v257 = vld [vmem:[%s217 + $0x14] sm:$0xf]
        %v258 = vld [vmem:[%s217 + $0x18] sm:$0xf]
        %v259 = vld [vmem:[%s217 + $0x1c] sm:$0xf]
        %v260 = vld [vmem:[%s217 + $0x20] sm:$0xf]
        %v261 = vld [vmem:[%s217 + $0x24] sm:$0xf]
        %v262 = vld [vmem:[%s217 + $0x28] sm:$0xf]
        %v263 = vld [vmem:[%s217 + $0x2c] sm:$0xf]
        %v264 = vld [vmem:[%s2] sm:$0xff]
        %v265 = vld [vmem:[%s2 + $0x8] sm:$0xff]
        %v266 = vld [vmem:[%s2 + $0x10] sm:$0xff]
        %v267 = vld [vmem:[%s2 + $0x18] sm:$0xff]
        %v268 = vld [vmem:[%s2 + $0x20] sm:$0xff]
        %v269 = vld [vmem:[%s2 + $0x28] sm:$0xff]
        %v270 = vld [vmem:[%s2 + $0x30] sm:$0xff]
        %v271 = vld [vmem:[%s2 + $0x38] sm:$0xff]
        %273 = vset.pattern.permute.xlu0 0
        %274 = vperm.xlu0 %273, %v264
        %v275 = vpop.permute.xlu0 %274
        %278 = vset.pattern.permute.xlu0 0
        %279 = vperm.xlu0 %278, %v265
        %v280 = vpop.permute.xlu0 %279
        %283 = vset.pattern.permute.xlu0 0
        %284 = vperm.xlu0 %283, %v266
        %v285 = vpop.permute.xlu0 %284
        %288 = vset.pattern.permute.xlu0 0
        %289 = vperm.xlu0 %288, %v267
        %v290 = vpop.permute.xlu0 %289
        %293 = vset.pattern.permute.xlu0 0
        %294 = vperm.xlu0 %293, %v268
        %v295 = vpop.permute.xlu0 %294
        %298 = vset.pattern.permute.xlu0 0
        %299 = vperm.xlu0 %298, %v269
        %v300 = vpop.permute.xlu0 %299
        %303 = vset.pattern.permute.xlu0 0
        %304 = vperm.xlu0 %303, %v270
        %v305 = vpop.permute.xlu0 %304
        %308 = vset.pattern.permute.xlu0 0
        %309 = vperm.xlu0 %308, %v271
        %v310 = vpop.permute.xlu0 %309
        %v320 = vunpack.c.l.b16 %v244
        %v321 = vunpack.c.l.b16 %v245
        %v322 = vunpack.c.l.b16 %v246
        %v323 = vunpack.c.l.b16 %v247
        %v324 = vunpack.c.l.b16 %v248
        %v325 = vunpack.c.l.b16 %v249
        %v326 = vunpack.c.l.b16 %v250
        %v327 = vunpack.c.l.b16 %v251
        %v328 = vpack.c.b16 %v321, %v320
        %v329 = vpack.c.b16 %v323, %v322
        %v330 = vpack.c.b16 %v325, %v324
        %v331 = vpack.c.b16 %v327, %v326
        %v344 = vunpack.c.l.b16 %v252
        %v345 = vunpack.c.l.b16 %v253
        %v346 = vunpack.c.l.b16 %v254
        %v347 = vunpack.c.l.b16 %v255
        %v348 = vunpack.c.l.b16 %v256
        %v349 = vunpack.c.l.b16 %v257
        %v350 = vunpack.c.l.b16 %v258
        %v351 = vunpack.c.l.b16 %v259
        %v352 = vunpack.c.l.b16 %v260
        %v353 = vunpack.c.l.b16 %v261
        %v354 = vunpack.c.l.b16 %v262
        %v355 = vunpack.c.l.b16 %v263
        %v356 = vpack.c.b16 %v345, %v344
        %v357 = vpack.c.b16 %v347, %v346
        %v358 = vpack.c.b16 %v349, %v348
        %v359 = vpack.c.b16 %v351, %v350
        %v360 = vpack.c.b16 %v353, %v352
        %v361 = vpack.c.b16 %v355, %v354
        %vm368 = vcmask 785408
        %v370 = vsel %vm368, %v328, 0
        %v373 = vsel %vm368, %v329, 0
        %v376 = vsel %vm368, %v330, 0
        %v379 = vsel %vm368, %v331, 0
        %381 = vmatprep.subr.bf16.mxu0 0
        %382 = vmatpush1.bf16.msra.mxu0 %v356
        %383 = vmatprep.subr.bf16.mxu0 0
        %384 = vmatpush1.bf16.msra.mxu0 %v357
        %385 = vmatprep.subr.bf16.mxu0 0
        %386 = vmatpush1.bf16.msra.mxu0 %v358
        %387 = vmatprep.subr.bf16.mxu0 0
        %388 = vmatpush1.bf16.msra.mxu0 %v359
        %389 = vmatprep.subr.bf16.mxu0 0
        %390 = vmatpush1.bf16.msra.mxu0 %v360
        %391 = vmatprep.subr.bf16.mxu0 0
        %392 = vmatpush1.bf16.msra.mxu0 %v361
        %393 = vmatprep.subr.bf16.mxu0 0
        %394 = vmatpush1.bf16.msra.mxu0 0
        %395 = vmatprep.subr.bf16.mxu0 0
        %396 = vmatpush1.bf16.msra.mxu0 0
        %397 = vmatprep.subr.bf16.mxu0 0
        %398 = vmatpush1.bf16.msra.mxu0 0
        %399 = vmatprep.subr.bf16.mxu0 0
        %400 = vmatpush1.bf16.msra.mxu0 0
        %401 = vmatprep.subr.bf16.mxu0 0
        %402 = vmatpush1.bf16.msra.mxu0 0
        %403 = vmatprep.subr.bf16.mxu0 0
        %404 = vmatpush1.bf16.msra.mxu0 0
        %405 = vmatprep.subr.bf16.mxu0 0
        %406 = vmatpush1.bf16.msra.mxu0 0
        %407 = vmatprep.subr.bf16.mxu0 0
        %408 = vmatpush1.bf16.msra.mxu0 0
        %409 = vmatprep.subr.bf16.mxu0 0
        %410 = vmatpush1.bf16.msra.mxu0 0
        %411 = vmatprep.subr.bf16.mxu0 0
        %412 = vmatpush1.bf16.msra.mxu0 0
        %413 = vmatprep.mubr.bf16.mxu0 0
        %414 = vmatmul.mubr.bf16.gmra.mrb[0].mxu0 %v370
        %v415 = vpop.f32.mrb[0].mxu0
        %v416 = vadd.f32 %v275, %v415
        %v417 = vpop.f32.mrb[0].mxu0
        %v418 = vpop.f32.mrb[0].mxu0
        %v419 = vadd.f32 %v280, %v418
        %v420 = vpop.f32.mrb[0].mxu0
        %421 = vmatprep.mubr.bf16.mxu0 0
        %422 = vmatmul.mubr.bf16.gmra.mrb[0].mxu0 %v373
        %v423 = vpop.f32.mrb[0].mxu0
        %v424 = vadd.f32 %v285, %v423
        %v425 = vpop.f32.mrb[0].mxu0
        %v426 = vpop.f32.mrb[0].mxu0
        %v427 = vadd.f32 %v290, %v426
        %v428 = vpop.f32.mrb[0].mxu0
        %429 = vmatprep.mubr.bf16.mxu0 0
        %430 = vmatmul.mubr.bf16.gmra.mrb[0].mxu0 %v376
        %v431 = vpop.f32.mrb[0].mxu0
        %v432 = vadd.f32 %v295, %v431
        %v433 = vpop.f32.mrb[0].mxu0
        %v434 = vpop.f32.mrb[0].mxu0
        %v435 = vadd.f32 %v300, %v434
        %v436 = vpop.f32.mrb[0].mxu0
        %437 = vmatprep.mubr.bf16.mxu0 0
        %438 = vmatmul.mubr.bf16.gmra.mrb[0].mxu0 %v379
        %v439 = vpop.f32.mrb[0].mxu0
        %v440 = vadd.f32 %v305, %v439
        %v441 = vpop.f32.mrb[0].mxu0
        %v442 = vpop.f32.mrb[0].mxu0
        %v443 = vadd.f32 %v310, %v442
        %v444 = vpop.f32.mrb[0].mxu0
        %445 = vdwg.mxu0
        %v446 = vmul.f32 %v416, 0.7978846
        %v447 = vmul.f32 %v419, 0.7978846
        %v448 = vmul.f32 %v424, 0.7978846
        %v449 = vmul.f32 %v427, 0.7978846
        %v450 = vmul.f32 %v432, 0.7978846
        %v451 = vmul.f32 %v435, 0.7978846
        %v452 = vmul.f32 %v440, 0.7978846
        %v453 = vmul.f32 %v443, 0.7978846
        %v454 = vmul.f32 %v416, 0.044715
        %v455 = vmul.f32 %v419, 0.044715
        %v456 = vmul.f32 %v424, 0.044715
        %v457 = vmul.f32 %v427, 0.044715
        %v458 = vmul.f32 %v432, 0.044715
        %v459 = vmul.f32 %v435, 0.044715
        %v460 = vmul.f32 %v440, 0.044715
        %v461 = vmul.f32 %v443, 0.044715
        %v462 = vmul.f32 %v454, %v416
        %v463 = vmul.f32 %v455, %v419
        %v464 = vmul.f32 %v456, %v424
        %v465 = vmul.f32 %v457, %v427
        %v466 = vmul.f32 %v458, %v432
        %v467 = vmul.f32 %v459, %v435
        %v468 = vmul.f32 %v460, %v440
        %v469 = vmul.f32 %v461, %v443
        %v470 = vadd.f32 %v462, 1.0
        %v471 = vadd.f32 %v463, 1.0
        %v472 = vadd.f32 %v464, 1.0
        %v473 = vadd.f32 %v465, 1.0
        %v474 = vadd.f32 %v466, 1.0
        %v475 = vadd.f32 %v467, 1.0
        %v476 = vadd.f32 %v468, 1.0
        %v477 = vadd.f32 %v469, 1.0
        %v478 = vmul.f32 %v446, %v470
        %v479 = vmul.f32 %v447, %v471
        %v480 = vmul.f32 %v448, %v472
        %v481 = vmul.f32 %v449, %v473
        %v482 = vmul.f32 %v450, %v474
        %v483 = vmul.f32 %v451, %v475
        %v484 = vmul.f32 %v452, %v476
        %v485 = vmul.f32 %v453, %v477
        %v486 = vmul.f32 %v416, 0.5
        %v487 = vmul.f32 %v419, 0.5
        %v488 = vmul.f32 %v424, 0.5
        %v489 = vmul.f32 %v427, 0.5
        %v490 = vmul.f32 %v432, 0.5
        %v491 = vmul.f32 %v435, 0.5
        %v492 = vmul.f32 %v440, 0.5
        %v493 = vmul.f32 %v443, 0.5
        %v494 = vtanh.pop %v478
        %v495 = vtanh.pop %v479
        %v496 = vtanh.pop %v480
        %v497 = vtanh.pop %v481
        %v498 = vtanh.pop %v482
        %v499 = vtanh.pop %v483
        %v500 = vtanh.pop %v484
        %v501 = vtanh.pop %v485
        %v502 = vadd.f32 %v494, 1.0
        %v503 = vadd.f32 %v495, 1.0
        %v504 = vadd.f32 %v496, 1.0
        %v505 = vadd.f32 %v497, 1.0
        %v506 = vadd.f32 %v498, 1.0
        %v507 = vadd.f32 %v499, 1.0
        %v508 = vadd.f32 %v500, 1.0
        %v509 = vadd.f32 %v501, 1.0
        %v510 = vmul.f32 %v486, %v502
        %v511 = vmul.f32 %v487, %v503
        %v512 = vmul.f32 %v488, %v504
        %v513 = vmul.f32 %v489, %v505
        %v514 = vmul.f32 %v490, %v506
        %v515 = vmul.f32 %v491, %v507
        %v516 = vmul.f32 %v492, %v508
        %v517 = vmul.f32 %v493, %v509
        %v518 = vld [vmem:[%s3] sm:$0xff]
        %v519 = vld [vmem:[%s3 + $0x8] sm:$0xff]
        %v520 = vld [vmem:[%s3 + $0x10] sm:$0xff]
        %v521 = vld [vmem:[%s3 + $0x18] sm:$0xff]
        %v522 = vld [vmem:[%s3 + $0x20] sm:$0xff]
        %v523 = vld [vmem:[%s3 + $0x28] sm:$0xff]
        %v524 = vld [vmem:[%s3 + $0x30] sm:$0xff]
        %v525 = vld [vmem:[%s3 + $0x38] sm:$0xff]
        %527 = vset.pattern.permute.xlu0 0
        %528 = vperm.xlu0 %527, %v518
        %v529 = vpop.permute.xlu0 %528
        %532 = vset.pattern.permute.xlu0 0
        %533 = vperm.xlu0 %532, %v519
        %v534 = vpop.permute.xlu0 %533
        %537 = vset.pattern.permute.xlu0 0
        %538 = vperm.xlu0 %537, %v520
        %v539 = vpop.permute.xlu0 %538
        %542 = vset.pattern.permute.xlu0 0
        %543 = vperm.xlu0 %542, %v521
        %v544 = vpop.permute.xlu0 %543
        %547 = vset.pattern.permute.xlu0 0
        %548 = vperm.xlu0 %547, %v522
        %v549 = vpop.permute.xlu0 %548
        %552 = vset.pattern.permute.xlu0 0
        %553 = vperm.xlu0 %552, %v523
        %v554 = vpop.permute.xlu0 %553
        %557 = vset.pattern.permute.xlu0 0
        %558 = vperm.xlu0 %557, %v524
        %v559 = vpop.permute.xlu0 %558
        %562 = vset.pattern.permute.xlu0 0
        %563 = vperm.xlu0 %562, %v525
        %v564 = vpop.permute.xlu0 %563
        %v566 = vmul.f32 %v510, %v529
        %v567 = vmul.f32 %v511, %v534
        %v568 = vmul.f32 %v512, %v539
        %v569 = vmul.f32 %v513, %v544
        %v570 = vmul.f32 %v514, %v549
        %v571 = vmul.f32 %v515, %v554
        %v572 = vmul.f32 %v516, %v559
        %v573 = vmul.f32 %v517, %v564
        %v574 = vadd.f32 %v566, %v567
        %v575 = vadd.f32 %v574, %v568
        %v576 = vadd.f32 %v575, %v569
        %v577 = vadd.f32 %v576, %v570
        %v578 = vadd.f32 %v577, %v571
        %v579 = vadd.f32 %v578, %v572
        %v580 = vadd.f32 %v579, %v573
        %v581 = vrot.slane %v580, 4
        %v582 = vadd.f32 %v580, %v581
        %v583 = vrot.slane %v582, 2
        %v584 = vadd.f32 %v582, %v583
        %v585 = vrot.slane %v584, 1
        %v586 = vadd.f32 %v584, %v585
        %s587 = scalar_lea.vmem %s1, 32
        %v588 = vld [vmem:[%s587] sm:$0xf]
        %v589 = vld [vmem:[%s587 + $0x4] sm:$0xf]
        %v590 = vld [vmem:[%s587 + $0x8] sm:$0xf]
        %v591 = vld [vmem:[%s587 + $0xc] sm:$0xf]
        %v592 = vld [vmem:[%s587 + $0x10] sm:$0xf]
        %v593 = vld [vmem:[%s587 + $0x14] sm:$0xf]
        %v594 = vld [vmem:[%s587 + $0x18] sm:$0xf]
        %v595 = vld [vmem:[%s587 + $0x1c] sm:$0xf]
        %s596 = scalar_lea.vmem %s217, 48 [#allocation3]
        %v597 = vld [vmem:[%s596] sm:$0xf]
        %v598 = vld [vmem:[%s596 + $0x4] sm:$0xf]
        %v599 = vld [vmem:[%s596 + $0x8] sm:$0xf]
        %v600 = vld [vmem:[%s596 + $0xc] sm:$0xf]
        %v601 = vld [vmem:[%s596 + $0x10] sm:$0xf]
        %v602 = vld [vmem:[%s596 + $0x14] sm:$0xf]
        %v603 = vld [vmem:[%s596 + $0x18] sm:$0xf]
        %v604 = vld [vmem:[%s596 + $0x1c] sm:$0xf]
        %v605 = vld [vmem:[%s596 + $0x20] sm:$0xf]
        %v606 = vld [vmem:[%s596 + $0x24] sm:$0xf]
        %v607 = vld [vmem:[%s596 + $0x28] sm:$0xf]
        %v608 = vld [vmem:[%s596 + $0x2c] sm:$0xf]
        %s609 = scalar_lea.vmem %s2, 64
        %v610 = vld [vmem:[%s609] sm:$0xff]
        %v611 = vld [vmem:[%s609 + $0x8] sm:$0xff]
        %v612 = vld [vmem:[%s609 + $0x10] sm:$0xff]
        %v613 = vld [vmem:[%s609 + $0x18] sm:$0xff]
        %v614 = vld [vmem:[%s609 + $0x20] sm:$0xff]
        %v615 = vld [vmem:[%s609 + $0x28] sm:$0xff]
        %v616 = vld [vmem:[%s609 + $0x30] sm:$0xff]
        %v617 = vld [vmem:[%s609 + $0x38] sm:$0xff]
        %619 = vset.pattern.permute.xlu0 0
        %620 = vperm.xlu0 %619, %v610
        %v621 = vpop.permute.xlu0 %620
        %624 = vset.pattern.permute.xlu0 0
        %625 = vperm.xlu0 %624, %v611
        %v626 = vpop.permute.xlu0 %625
        %629 = vset.pattern.permute.xlu0 0
        %630 = vperm.xlu0 %629, %v612
        %v631 = vpop.permute.xlu0 %630
        %634 = vset.pattern.permute.xlu0 0
        %635 = vperm.xlu0 %634, %v613
        %v636 = vpop.permute.xlu0 %635
        %639 = vset.pattern.permute.xlu0 0
        %640 = vperm.xlu0 %639, %v614
        %v641 = vpop.permute.xlu0 %640
        %644 = vset.pattern.permute.xlu0 0
        %645 = vperm.xlu0 %644, %v615
        %v646 = vpop.permute.xlu0 %645
        %649 = vset.pattern.permute.xlu0 0
        %650 = vperm.xlu0 %649, %v616
        %v651 = vpop.permute.xlu0 %650
        %654 = vset.pattern.permute.xlu0 0
        %655 = vperm.xlu0 %654, %v617
        %v656 = vpop.permute.xlu0 %655
        %v666 = vunpack.c.l.b16 %v588
        %v667 = vunpack.c.l.b16 %v589
        %v668 = vunpack.c.l.b16 %v590
        %v669 = vunpack.c.l.b16 %v591
        %v670 = vunpack.c.l.b16 %v592
        %v671 = vunpack.c.l.b16 %v593
        %v672 = vunpack.c.l.b16 %v594
        %v673 = vunpack.c.l.b16 %v595
        %v674 = vpack.c.b16 %v667, %v666
        %v675 = vpack.c.b16 %v669, %v668
        %v676 = vpack.c.b16 %v671, %v670
        %v677 = vpack.c.b16 %v673, %v672
        %v690 = vunpack.c.l.b16 %v597
        %v691 = vunpack.c.l.b16 %v598
        %v692 = vunpack.c.l.b16 %v599
        %v693 = vunpack.c.l.b16 %v600
        %v694 = vunpack.c.l.b16 %v601
        %v695 = vunpack.c.l.b16 %v602
        %v696 = vunpack.c.l.b16 %v603
        %v697 = vunpack.c.l.b16 %v604
        %v698 = vunpack.c.l.b16 %v605
        %v699 = vunpack.c.l.b16 %v606
        %v700 = vunpack.c.l.b16 %v607
        %v701 = vunpack.c.l.b16 %v608
        %v702 = vpack.c.b16 %v691, %v690
        %v703 = vpack.c.b16 %v693, %v692
        %v704 = vpack.c.b16 %v695, %v694
        %v705 = vpack.c.b16 %v697, %v696
        %v706 = vpack.c.b16 %v699, %v698
        %v707 = vpack.c.b16 %v701, %v700
        %v715 = vsel %vm368, %v674, 0
        %v718 = vsel %vm368, %v675, 0
        %v721 = vsel %vm368, %v676, 0
        %v724 = vsel %vm368, %v677, 0
        %726 = vmatprep.subr.bf16.mxu0 0
        %727 = vmatpush1.bf16.msra.mxu0 %v702
        %728 = vmatprep.subr.bf16.mxu0 0
        %729 = vmatpush1.bf16.msra.mxu0 %v703
        %730 = vmatprep.subr.bf16.mxu0 0
        %731 = vmatpush1.bf16.msra.mxu0 %v704
        %732 = vmatprep.subr.bf16.mxu0 0
        %733 = vmatpush1.bf16.msra.mxu0 %v705
        %734 = vmatprep.subr.bf16.mxu0 0
        %735 = vmatpush1.bf16.msra.mxu0 %v706
        %736 = vmatprep.subr.bf16.mxu0 0
        %737 = vmatpush1.bf16.msra.mxu0 %v707
        %738 = vmatprep.subr.bf16.mxu0 0
        %739 = vmatpush1.bf16.msra.mxu0 0
        %740 = vmatprep.subr.bf16.mxu0 0
        %741 = vmatpush1.bf16.msra.mxu0 0
        %742 = vmatprep.subr.bf16.mxu0 0
        %743 = vmatpush1.bf16.msra.mxu0 0
        %744 = vmatprep.subr.bf16.mxu0 0
        %745 = vmatpush1.bf16.msra.mxu0 0
        %746 = vmatprep.subr.bf16.mxu0 0
        %747 = vmatpush1.bf16.msra.mxu0 0
        %748 = vmatprep.subr.bf16.mxu0 0
        %749 = vmatpush1.bf16.msra.mxu0 0
        %750 = vmatprep.subr.bf16.mxu0 0
        %751 = vmatpush1.bf16.msra.mxu0 0
        %752 = vmatprep.subr.bf16.mxu0 0
        %753 = vmatpush1.bf16.msra.mxu0 0
        %754 = vmatprep.subr.bf16.mxu0 0
        %755 = vmatpush1.bf16.msra.mxu0 0
        %756 = vmatprep.subr.bf16.mxu0 0
        %757 = vmatpush1.bf16.msra.mxu0 0
        %758 = vmatprep.mubr.bf16.mxu0 0
        %759 = vmatmul.mubr.bf16.gmra.mrb[0].mxu0 %v715
        %v760 = vpop.f32.mrb[0].mxu0
        %v761 = vadd.f32 %v621, %v760
        %v762 = vpop.f32.mrb[0].mxu0
        %v763 = vpop.f32.mrb[0].mxu0
        %v764 = vadd.f32 %v626, %v763
        %v765 = vpop.f32.mrb[0].mxu0
        %766 = vmatprep.mubr.bf16.mxu0 0
        %767 = vmatmul.mubr.bf16.gmra.mrb[0].mxu0 %v718
        %v768 = vpop.f32.mrb[0].mxu0
        %v769 = vadd.f32 %v631, %v768
        %v770 = vpop.f32.mrb[0].mxu0
        %v771 = vpop.f32.mrb[0].mxu0
        %v772 = vadd.f32 %v636, %v771
        %v773 = vpop.f32.mrb[0].mxu0
        %774 = vmatprep.mubr.bf16.mxu0 0
        %775 = vmatmul.mubr.bf16.gmra.mrb[0].mxu0 %v721
        %v776 = vpop.f32.mrb[0].mxu0
        %v777 = vadd.f32 %v641, %v776
        %v778 = vpop.f32.mrb[0].mxu0
        %v779 = vpop.f32.mrb[0].mxu0
        %v780 = vadd.f32 %v646, %v779
        %v781 = vpop.f32.mrb[0].mxu0
        %782 = vmatprep.mubr.bf16.mxu0 0
        %783 = vmatmul.mubr.bf16.gmra.mrb[0].mxu0 %v724
        %v784 = vpop.f32.mrb[0].mxu0
        %v785 = vadd.f32 %v651, %v784
        %v786 = vpop.f32.mrb[0].mxu0
        %v787 = vpop.f32.mrb[0].mxu0
        %v788 = vadd.f32 %v656, %v787
        %v789 = vpop.f32.mrb[0].mxu0
        %790 = vdwg.mxu0
        %v791 = vmul.f32 %v761, 0.7978846
        %v792 = vmul.f32 %v764, 0.7978846
        %v793 = vmul.f32 %v769, 0.7978846
        %v794 = vmul.f32 %v772, 0.7978846
        %v795 = vmul.f32 %v777, 0.7978846
        %v796 = vmul.f32 %v780, 0.7978846
        %v797 = vmul.f32 %v785, 0.7978846
        %v798 = vmul.f32 %v788, 0.7978846
        %v799 = vmul.f32 %v761, 0.044715
        %v800 = vmul.f32 %v764, 0.044715
        %v801 = vmul.f32 %v769, 0.044715
        %v802 = vmul.f32 %v772, 0.044715
        %v803 = vmul.f32 %v777, 0.044715
        %v804 = vmul.f32 %v780, 0.044715
        %v805 = vmul.f32 %v785, 0.044715
        %v806 = vmul.f32 %v788, 0.044715
        %v807 = vmul.f32 %v799, %v761
        %v808 = vmul.f32 %v800, %v764
        %v809 = vmul.f32 %v801, %v769
        %v810 = vmul.f32 %v802, %v772
        %v811 = vmul.f32 %v803, %v777
        %v812 = vmul.f32 %v804, %v780
        %v813 = vmul.f32 %v805, %v785
        %v814 = vmul.f32 %v806, %v788
        %v815 = vadd.f32 %v807, 1.0
        %v816 = vadd.f32 %v808, 1.0
        %v817 = vadd.f32 %v809, 1.0
        %v818 = vadd.f32 %v810, 1.0
        %v819 = vadd.f32 %v811, 1.0
        %v820 = vadd.f32 %v812, 1.0
        %v821 = vadd.f32 %v813, 1.0
        %v822 = vadd.f32 %v814, 1.0
        %v823 = vmul.f32 %v791, %v815
        %v824 = vmul.f32 %v792, %v816
        %v825 = vmul.f32 %v793, %v817
        %v826 = vmul.f32 %v794, %v818
        %v827 = vmul.f32 %v795, %v819
        %v828 = vmul.f32 %v796, %v820
        %v829 = vmul.f32 %v797, %v821
        %v830 = vmul.f32 %v798, %v822
        %v831 = vmul.f32 %v761, 0.5
        %v832 = vmul.f32 %v764, 0.5
        %v833 = vmul.f32 %v769, 0.5
        %v834 = vmul.f32 %v772, 0.5
        %v835 = vmul.f32 %v777, 0.5
        %v836 = vmul.f32 %v780, 0.5
        %v837 = vmul.f32 %v785, 0.5
        %v838 = vmul.f32 %v788, 0.5
        %v839 = vtanh.pop %v823
        %v840 = vtanh.pop %v824
        %v841 = vtanh.pop %v825
        %v842 = vtanh.pop %v826
        %v843 = vtanh.pop %v827
        %v844 = vtanh.pop %v828
        %v845 = vtanh.pop %v829
        %v846 = vtanh.pop %v830
        %v847 = vadd.f32 %v839, 1.0
        %v848 = vadd.f32 %v840, 1.0
        %v849 = vadd.f32 %v841, 1.0
        %v850 = vadd.f32 %v842, 1.0
        %v851 = vadd.f32 %v843, 1.0
        %v852 = vadd.f32 %v844, 1.0
        %v853 = vadd.f32 %v845, 1.0
        %v854 = vadd.f32 %v846, 1.0
        %v855 = vmul.f32 %v831, %v847
        %v856 = vmul.f32 %v832, %v848
        %v857 = vmul.f32 %v833, %v849
        %v858 = vmul.f32 %v834, %v850
        %v859 = vmul.f32 %v835, %v851
        %v860 = vmul.f32 %v836, %v852
        %v861 = vmul.f32 %v837, %v853
        %v862 = vmul.f32 %v838, %v854
        %s863 = scalar_lea.vmem %s3, 64
        %v864 = vld [vmem:[%s863] sm:$0xff]
        %v865 = vld [vmem:[%s863 + $0x8] sm:$0xff]
        %v866 = vld [vmem:[%s863 + $0x10] sm:$0xff]
        %v867 = vld [vmem:[%s863 + $0x18] sm:$0xff]
        %v868 = vld [vmem:[%s863 + $0x20] sm:$0xff]
        %v869 = vld [vmem:[%s863 + $0x28] sm:$0xff]
        %v870 = vld [vmem:[%s863 + $0x30] sm:$0xff]
        %v871 = vld [vmem:[%s863 + $0x38] sm:$0xff]
        %873 = vset.pattern.permute.xlu0 0
        %874 = vperm.xlu0 %873, %v864
        %v875 = vpop.permute.xlu0 %874
        %878 = vset.pattern.permute.xlu0 0
        %879 = vperm.xlu0 %878, %v865
        %v880 = vpop.permute.xlu0 %879
        %883 = vset.pattern.permute.xlu0 0
        %884 = vperm.xlu0 %883, %v866
        %v885 = vpop.permute.xlu0 %884
        %888 = vset.pattern.permute.xlu0 0
        %889 = vperm.xlu0 %888, %v867
        %v890 = vpop.permute.xlu0 %889
        %893 = vset.pattern.permute.xlu0 0
        %894 = vperm.xlu0 %893, %v868
        %v895 = vpop.permute.xlu0 %894
        %898 = vset.pattern.permute.xlu0 0
        %899 = vperm.xlu0 %898, %v869
        %v900 = vpop.permute.xlu0 %899
        %903 = vset.pattern.permute.xlu0 0
        %904 = vperm.xlu0 %903, %v870
        %v905 = vpop.permute.xlu0 %904
        %908 = vset.pattern.permute.xlu0 0
        %909 = vperm.xlu0 %908, %v871
        %v910 = vpop.permute.xlu0 %909
        %v912 = vmul.f32 %v855, %v875
        %v913 = vmul.f32 %v856, %v880
        %v914 = vmul.f32 %v857, %v885
        %v915 = vmul.f32 %v858, %v890
        %v916 = vmul.f32 %v859, %v895
        %v917 = vmul.f32 %v860, %v900
        %v918 = vmul.f32 %v861, %v905
        %v919 = vmul.f32 %v862, %v910
        %v920 = vadd.f32 %v912, %v913
        %v921 = vadd.f32 %v920, %v914
        %v922 = vadd.f32 %v921, %v915
        %v923 = vadd.f32 %v922, %v916
        %v924 = vadd.f32 %v923, %v917
        %v925 = vadd.f32 %v924, %v918
        %v926 = vadd.f32 %v925, %v919
        %v927 = vrot.slane %v926, 4
        %v928 = vadd.f32 %v926, %v927
        %v929 = vrot.slane %v928, 2
        %v930 = vadd.f32 %v928, %v929
        %v931 = vrot.slane %v930, 1
        %v932 = vadd.f32 %v930, %v931
        %v933 = vadd.f32 %v586, %v932
        %v934 = vld [vmem:[#allocation2] sm:$0x1]
        %936 = vset.pattern.permute.xlu0 0
        %937 = vperm.xlu0 %936, %v934
        %v938 = vpop.permute.xlu0 %937
        %v940 = vlaneseq
        %v941 = vshrl.u32 %v940, 7
        %v942 = vsub.s32 0, %v941
        %v943 = vrot.slane %v938, %v942
        %v944 = vadd.f32 %v933, %v943
        %945 = vst [vmem:[%s242] sm:$0x1] %v944
        %s946 = sand.u32 %s142, 1
        %s947 = scalar_lea.sflag [#allocation5], %s946
        %s948 = sand.u32 %s142, 1
        %s949 = scalar_lea.vmem [#allocation6], %s948
        // Predicated region
        $region45: #{tpu_custom_call.1} parent=39 // pred_check
          %p950 = pneg %p152
        $region46: #{tpu_custom_call.1} parent=39 // pred_check_branch
          %952 = sbr.rel (%p950) target = $region48
        $region47: #{tpu_custom_call.1} parent=39 // pred_region
          %s954 = ssub.s32 16, 16
          %955 = vsyncadd %s947, %s954
          %s956 = smul.addr %s24, 16
          %s957 = scalar_lea.hbm %s5, %s956
          %s959 = sshll.u32 %s949, 4
          %s960 = int_to_ptr.vmem [resolvable:$true] %s959
          %962 = dma.vmem_to_hbm [thread:$0]  %s960, 16, %s957, %s947
        $region48: #{tpu_custom_call.1} parent=39 // pred_fallthru
          _
      $region40: #{tpu_custom_call.1} parent=5 // pred_fallthru
        _
      %p963 = scmp.le.s32.totalorder 2, %s19
      // Predicated region
      $region49: #{tpu_custom_call.1} parent=5 // pred_check
        %p964 = pneg %p963
      $region50: #{tpu_custom_call.1} parent=5 // pred_check_branch
        %966 = sbr.rel (%p964) target = $region52
      $region51: #{tpu_custom_call.1} parent=5 // pred_region
        %s967 = ssub.s32 %s19, 2
        // Predicated region
        $region53: #{tpu_custom_call.1} parent=51 // pred_check
          %p968 = pneg %p158
        $region54: #{tpu_custom_call.1} parent=51 // pred_check_branch
          %970 = sbr.rel (%p968) target = $region56
        $region55: #{tpu_custom_call.1} parent=51 // pred_region
          %s971 = sand.u32 %s143, 1
          %s972 = scalar_lea.sflag [#allocation5], %s971
          %s973 = sand.u32 %s143, 1
          %s974 = scalar_lea.vmem [#allocation6], %s973
          %975 = dma.done %s972, 16
        $region56: #{tpu_custom_call.1} parent=51 // pred_fallthru
          _
      $region52: #{tpu_custom_call.1} parent=5 // pred_fallthru
        _
    $region6: #{tpu_custom_call.1} parent=1 // loop_footer
      %s23 = sadd.s32 1, %s19
    $region7: #{tpu_custom_call.1} parent=1 // loop_footer_branch
      %18 = sbr.rel target = $region3
    $region8: #{tpu_custom_call.1} parent=1 // loop_exit
      _
    %976 = vsyncpa [#allocation4], 1
    %s977 = scalar_lea.sflag [#allocation4], 1
    %978 = vsyncpa %s977, 1
    %979 = vsyncpa [#allocation5], 1
    %s980 = scalar_lea.sflag [#allocation5], 1
    %981 = vsyncpa %s980, 1

</llo_original>
